<compile_context>
chip_gen: v5e
topology: v5e:2x2
jax: 0.10.0
libtpu: 0.0.40
codegen_flags: <defaults>
</compile_context>

<pallas_src>
import functools

import jax
import jax.numpy as jnp
import numpy as np
from jax.experimental import pallas as pl
from jax.experimental.pallas import tpu as pltpu

# ---- hyperparameters (small, consistent with the module's forward) ----------
EMBEDDING_DIM = 32      # D == INPUT_SIZE of the word LSTM
HIDDEN_SIZE = 32        # H
NUM_LAYER = 1
BIDIRECTIONAL = False   # hidden2label is Linear(H, LABEL_SIZE)
LABEL_SIZE = 4
SEQ_LEN = 8             # words per sentence
NUM_EMOJI = 3           # emojis attached to each sentence
TEXT_VOCAB_SIZE = 50
EMOJI_VOCAB_SIZE = 20

BATCH = 16              # independent sentences fused per call
BATCH_BLOCK = 8         # sentences per grid step (one sublane tile)
LANE = 128              # lane-dense output width


# ----------------------------- fused Pallas kernel ----------------------------
def fused_kernel(x_ref, lstm_w_ref, h2l_ref, out_ref):
    """LSTM recurrence + (identity) attention sum + hidden2label for BB sentences.

    x_ref:      (S, BB, D)     time-major sentence embeddings for this block
    lstm_w_ref: (D+H+1, 4H)    [W_ih^T ; W_hh^T ; (b_ih+b_hh)]  gate order i,f,g,o
    h2l_ref:    (H+1, 128)     [W_h2l^T ; b_h2l], zero-padded to 128 lanes
    out_ref:    (BB, 128)      logits in [:, :L], zeros elsewhere
    """
    S, BB, D = x_ref.shape
    H4 = lstm_w_ref.shape[1]
    H = H4 // 4

    # bf16 operands for the MXU; accumulation and all state math stay f32.
    wih_bf = lstm_w_ref[0:D, :].astype(jnp.bfloat16)          # (D, 4H)
    whh_bf = lstm_w_ref[D:D + H, :].astype(jnp.bfloat16)      # (H, 4H)
    bias = lstm_w_ref[D + H:D + H + 1, :]                     # (1, 4H) f32

    # Input projection hoisted off the serial recurrence: independent of h,
    # so these S matmuls are fully overlappable with the chained h@W_hh dots.
    xw = [jnp.dot(x_ref[t].astype(jnp.bfloat16), wih_bf,
                  preferred_element_type=jnp.float32) + bias
          for t in range(S)]                                   # S x (BB, 4H)

    h = jnp.zeros((BB, H), jnp.float32)
    c = jnp.zeros((BB, H), jnp.float32)
    acc = jnp.zeros((BB, H), jnp.float32)   # running sum_t h_t == attn_applied

    # S is tiny and static -> unrolled recurrence (full scheduler visibility).
    for t in range(S):
        gates = xw[t] + jnp.dot(h.astype(jnp.bfloat16), whh_bf,
                                preferred_element_type=jnp.float32)  # (BB, 4H)
        # Whole-vreg EUP passes, then slice the activated gates; with BB=8
        # rows the lane-offset extraction amortizes over a full sublane tile.
        sig = jax.nn.sigmoid(gates)
        th = jnp.tanh(gates)
        i = sig[:, 0:H]
        f = sig[:, H:2 * H]
        g = th[:, 2 * H:3 * H]
        o = sig[:, 3 * H:4 * H]
        c = f * c + i * g
        h = o * jnp.tanh(c)
        acc = acc + h          # off the h/c dependency chain

    # F.softmax(logits, dim=1) over a size-1 dim is identically 1.0 (for finite
    # logits), so bmm(attn_weights^T, lstm_out) == column-sum of lstm_out == acc.
    h2l_w_bf = h2l_ref[0:H, :].astype(jnp.bfloat16)            # (H, 128)
    h2l_b = h2l_ref[H:H + 1, :]                                # (1, 128) f32
    out_ref[...] = (jnp.dot(acc.astype(jnp.bfloat16), h2l_w_bf,
                            preferred_element_type=jnp.float32) + h2l_b)


# ------------------------------ parameter packing -----------------------------
def pack_params(params):
    """One-time packing: transposes / concats / lane-padding hoisted out of the
    per-call path."""
    D, H, L = EMBEDDING_DIM, HIDDEN_SIZE, LABEL_SIZE
    lstm_pack = jnp.concatenate(
        [jnp.asarray(params["w_ih"].T, jnp.float32),                        # (D, 4H)
         jnp.asarray(params["w_hh"].T, jnp.float32),                        # (H, 4H)
         jnp.asarray((params["b_ih"] + params["b_hh"]).reshape(1, 4 * H),
                     jnp.float32)],                                         # (1, 4H)
        axis=0)                                                             # (D+H+1, 4H)
    h2l_pack = jnp.zeros((H + 1, LANE), jnp.float32)
    h2l_pack = h2l_pack.at[0:H, 0:L].set(jnp.asarray(params["h2l_w"].T, jnp.float32))
    h2l_pack = h2l_pack.at[H, 0:L].set(jnp.asarray(params["h2l_b"], jnp.float32))
    return {
        "word_emb": jnp.asarray(params["word_emb"], jnp.float32),
        "lstm_pack": lstm_pack,       # (D+H+1, 4H)
        "h2l_pack": h2l_pack,         # (H+1, 128)  lane-padded
    }


# ------------------------------ jitted forward ---------------------------------
@jax.jit
def forward_batch(sentence_ids, emoji_ids, packed):
    """sentence_ids: (B, S) int32; emoji_ids: (B, E) int32 -> (B, L) logits.

    The emoji-mean / attn-linear / softmax branch is mathematically the
    identity (softmax over a size-1 axis == 1.0 for finite logits), so it
    cannot affect the output and is dropped from the kernel; the pure-JAX
    reference computes it in full and is asserted against.
    """
    del emoji_ids
    B, S = sentence_ids.shape
    D = packed["word_emb"].shape[1]
    lstm_pack = packed["lstm_pack"]
    h2l_pack = packed["h2l_pack"]

    # Embedding gather (vocab-sized gather stays in plain JAX), time-major.
    x = packed["word_emb"][sentence_ids.T]                    # (S, B, D)

    nb = B // BATCH_BLOCK
    out = pl.pallas_call(
        fused_kernel,
        out_shape=jax.ShapeDtypeStruct((B, LANE), jnp.float32),
        grid=(nb,),
        in_specs=[
            pl.BlockSpec((S, BATCH_BLOCK, D), lambda i: (0, i, 0)),
            pl.BlockSpec(lstm_pack.shape, lambda i: (0, 0)),
            pl.BlockSpec(h2l_pack.shape, lambda i: (0, 0)),
        ],
        out_specs=pl.BlockSpec((BATCH_BLOCK, LANE), lambda i: (i, 0)),
        compiler_params=pltpu.CompilerParams(
            dimension_semantics=("parallel",)),
    )(x, lstm_pack, h2l_pack)
    return out[:, :LABEL_SIZE]                                # (B, L)


# ------------------------------ pure-JAX reference ----------------------------
def reference_forward(sentence_ids, emoji_ids, params):
    """Single-sentence reference mirroring the PyTorch forward exactly."""
    sent = params["word_emb"][sentence_ids]                   # (S, D)
    emoji = params["emoji_emb"][emoji_ids]                    # (E, D)
    emoji_mean = jnp.mean(emoji, axis=0, keepdims=True)       # (1, D)
    H = HIDDEN_SIZE
    h = jnp.zeros((H,), jnp.float32)
    c = jnp.zeros((H,), jnp.float32)
    outs = []
    for t in range(sent.shape[0]):
        g = (sent[t] @ params["w_ih"].T + params["b_ih"]
             + h @ params["w_hh"].T + params["b_hh"])
        i, f, gg, o = jnp.split(g, 4)
        i, f, o = jax.nn.sigmoid(i), jax.nn.sigmoid(f), jax.nn.sigmoid(o)
        gg = jnp.tanh(gg)
        c = f * c + i * gg
        h = o * jnp.tanh(c)
        outs.append(h)
    lstm_out = jnp.stack(outs)                                 # (S, H)
    temp = jnp.concatenate(
        [sent, jnp.broadcast_to(emoji_mean, sent.shape)], axis=1)
    logits = temp @ params["attn_w"].T + params["attn_b"]      # (S, 1)
    attn_w = jax.nn.softmax(logits, axis=1)                    # all ones (size-1 axis)
    attn_applied = attn_w.T @ lstm_out                         # (1, H)
    return attn_applied @ params["h2l_w"].T + params["h2l_b"]  # (1, L)


# ----------------------------------- main --------------------------------------
if __name__ == "__main__":
    key = jax.random.PRNGKey(0)
    ks = jax.random.split(key, 12)
    s = 0.1
    D, H, L = EMBEDDING_DIM, HIDDEN_SIZE, LABEL_SIZE
    params = {
        "word_emb": jax.random.normal(ks[0], (TEXT_VOCAB_SIZE, D), jnp.float32) * s,
        "emoji_emb": jax.random.normal(ks[1], (EMOJI_VOCAB_SIZE, D), jnp.float32) * s,
        "w_ih": jax.random.normal(ks[2], (4 * H, D), jnp.float32) * s,
        "w_hh": jax.random.normal(ks[3], (4 * H, H), jnp.float32) * s,
        "b_ih": jax.random.normal(ks[4], (4 * H,), jnp.float32) * s,
        "b_hh": jax.random.normal(ks[5], (4 * H,), jnp.float32) * s,
        "attn_w": jax.random.normal(ks[6], (1, 2 * D), jnp.float32) * s,
        "attn_b": jax.random.normal(ks[7], (1,), jnp.float32) * s,
        "h2l_w": jax.random.normal(ks[8], (L, H), jnp.float32) * s,
        "h2l_b": jax.random.normal(ks[9], (L,), jnp.float32) * s,
    }
    sentence_ids = jax.random.randint(ks[10], (BATCH, SEQ_LEN), 0, TEXT_VOCAB_SIZE)
    emoji_ids = jax.random.randint(ks[11], (BATCH, NUM_EMOJI), 0, EMOJI_VOCAB_SIZE)

    packed = pack_params(params)            # packed once, reused every call

    out = forward_batch(sentence_ids, emoji_ids, packed)      # (B, L)
    out = jax.block_until_ready(out)

    # Per-sentence pure-JAX reference (full emoji / attention / softmax path).
    ref = jnp.concatenate(
        [reference_forward(sentence_ids[b], emoji_ids[b], params)
         for b in range(BATCH)], axis=0)
    ref = jax.block_until_ready(ref)

    # bf16 MXU operands with f32 accumulation -> comfortably within 2e-2.
    if not np.allclose(np.asarray(out), np.asarray(ref), rtol=2e-2, atol=2e-2):
        raise AssertionError("Pallas output does not match pure-JAX reference")

    print("KERNEL_OK")
</pallas_src>

<mosaic_0001>
module attributes {stable_mosaic.version = 11 : i64} {
  func.func @fused_kernel(%arg0: i32, %arg1: memref<8x8x32xf32, #tpu.memory_space<vmem>>, %arg2: memref<65x128xf32, #tpu.memory_space<vmem>>, %arg3: memref<33x128xf32, #tpu.memory_space<vmem>>, %arg4: memref<8x128xf32, #tpu.memory_space<vmem>>) attributes {dimension_semantics = [#tpu.dimension_semantics<parallel>], iteration_bounds = array<i64: 2>, scalar_prefetch = 0 : i64, scratch_operands = 0 : i64, tpu.core_type = #tpu.core_type<tc>, window_params = [{transform_indices = @transform_0, window_bounds = array<i64: 8, 8, 32>}, {pipeline_mode = #tpu.pipeline_mode<synchronous>, transform_indices = @transform_1, window_bounds = array<i64: 65, 128>}, {pipeline_mode = #tpu.pipeline_mode<synchronous>, transform_indices = @transform_2, window_bounds = array<i64: 33, 128>}, {transform_indices = @transform_3, window_bounds = array<i64: 8, 128>}]} {
    %c0 = arith.constant 0 : index
    %c0_0 = arith.constant 0 : index
    %0 = vector.load %arg2[%c0, %c0_0] : memref<65x128xf32, #tpu.memory_space<vmem>>, vector<32x128xf32>
    %1 = arith.truncf %0 : vector<32x128xf32> to vector<32x128xbf16>
    %c32 = arith.constant 32 : index
    %c0_1 = arith.constant 0 : index
    %2 = vector.load %arg2[%c32, %c0_1] : memref<65x128xf32, #tpu.memory_space<vmem>>, vector<32x128xf32>
    %3 = arith.truncf %2 : vector<32x128xf32> to vector<32x128xbf16>
    %c64 = arith.constant 64 : index
    %c0_2 = arith.constant 0 : index
    %4 = vector.load %arg2[%c64, %c0_2] : memref<65x128xf32, #tpu.memory_space<vmem>>, vector<1x128xf32>
    %c0_3 = arith.constant 0 : index
    %c0_4 = arith.constant 0 : index
    %c0_5 = arith.constant 0 : index
    %5 = vector.load %arg1[%c0_3, %c0_4, %c0_5] : memref<8x8x32xf32, #tpu.memory_space<vmem>>, vector<1x8x32xf32>
    %6 = vector.shape_cast %5 : vector<1x8x32xf32> to vector<8x32xf32>
    %7 = arith.truncf %6 : vector<8x32xf32> to vector<8x32xbf16>
    %cst = arith.constant dense<0.000000e+00> : vector<8x128xf32>
    %8 = tpu.matmul %7, %1, %cst {dimension_numbers = #tpu.dot_dimension_numbers<[1], [0], [0], [1], [0, 0, 1, 1], [], []>} : vector<8x32xbf16>, vector<32x128xbf16>, vector<8x128xf32> -> vector<8x128xf32>
    %9 = vector.broadcast %4 : vector<1x128xf32> to vector<8x128xf32>
    %10 = arith.addf %8, %9 : vector<8x128xf32>
    %c1 = arith.constant 1 : index
    %c0_6 = arith.constant 0 : index
    %c0_7 = arith.constant 0 : index
    %11 = vector.load %arg1[%c1, %c0_6, %c0_7] : memref<8x8x32xf32, #tpu.memory_space<vmem>>, vector<1x8x32xf32>
    %12 = vector.shape_cast %11 : vector<1x8x32xf32> to vector<8x32xf32>
    %13 = arith.truncf %12 : vector<8x32xf32> to vector<8x32xbf16>
    %cst_8 = arith.constant dense<0.000000e+00> : vector<8x128xf32>
    %14 = tpu.matmul %13, %1, %cst_8 {dimension_numbers = #tpu.dot_dimension_numbers<[1], [0], [0], [1], [0, 0, 1, 1], [], []>} : vector<8x32xbf16>, vector<32x128xbf16>, vector<8x128xf32> -> vector<8x128xf32>
    %15 = vector.broadcast %4 : vector<1x128xf32> to vector<8x128xf32>
    %16 = arith.addf %14, %15 : vector<8x128xf32>
    %c2 = arith.constant 2 : index
    %c0_9 = arith.constant 0 : index
    %c0_10 = arith.constant 0 : index
    %17 = vector.load %arg1[%c2, %c0_9, %c0_10] : memref<8x8x32xf32, #tpu.memory_space<vmem>>, vector<1x8x32xf32>
    %18 = vector.shape_cast %17 : vector<1x8x32xf32> to vector<8x32xf32>
    %19 = arith.truncf %18 : vector<8x32xf32> to vector<8x32xbf16>
    %cst_11 = arith.constant dense<0.000000e+00> : vector<8x128xf32>
    %20 = tpu.matmul %19, %1, %cst_11 {dimension_numbers = #tpu.dot_dimension_numbers<[1], [0], [0], [1], [0, 0, 1, 1], [], []>} : vector<8x32xbf16>, vector<32x128xbf16>, vector<8x128xf32> -> vector<8x128xf32>
    %21 = vector.broadcast %4 : vector<1x128xf32> to vector<8x128xf32>
    %22 = arith.addf %20, %21 : vector<8x128xf32>
    %c3 = arith.constant 3 : index
    %c0_12 = arith.constant 0 : index
    %c0_13 = arith.constant 0 : index
    %23 = vector.load %arg1[%c3, %c0_12, %c0_13] : memref<8x8x32xf32, #tpu.memory_space<vmem>>, vector<1x8x32xf32>
    %24 = vector.shape_cast %23 : vector<1x8x32xf32> to vector<8x32xf32>
    %25 = arith.truncf %24 : vector<8x32xf32> to vector<8x32xbf16>
    %cst_14 = arith.constant dense<0.000000e+00> : vector<8x128xf32>
    %26 = tpu.matmul %25, %1, %cst_14 {dimension_numbers = #tpu.dot_dimension_numbers<[1], [0], [0], [1], [0, 0, 1, 1], [], []>} : vector<8x32xbf16>, vector<32x128xbf16>, vector<8x128xf32> -> vector<8x128xf32>
    %27 = vector.broadcast %4 : vector<1x128xf32> to vector<8x128xf32>
    %28 = arith.addf %26, %27 : vector<8x128xf32>
    %c4 = arith.constant 4 : index
    %c0_15 = arith.constant 0 : index
    %c0_16 = arith.constant 0 : index
    %29 = vector.load %arg1[%c4, %c0_15, %c0_16] : memref<8x8x32xf32, #tpu.memory_space<vmem>>, vector<1x8x32xf32>
    %30 = vector.shape_cast %29 : vector<1x8x32xf32> to vector<8x32xf32>
    %31 = arith.truncf %30 : vector<8x32xf32> to vector<8x32xbf16>
    %cst_17 = arith.constant dense<0.000000e+00> : vector<8x128xf32>
    %32 = tpu.matmul %31, %1, %cst_17 {dimension_numbers = #tpu.dot_dimension_numbers<[1], [0], [0], [1], [0, 0, 1, 1], [], []>} : vector<8x32xbf16>, vector<32x128xbf16>, vector<8x128xf32> -> vector<8x128xf32>
    %33 = vector.broadcast %4 : vector<1x128xf32> to vector<8x128xf32>
    %34 = arith.addf %32, %33 : vector<8x128xf32>
    %c5 = arith.constant 5 : index
    %c0_18 = arith.constant 0 : index
    %c0_19 = arith.constant 0 : index
    %35 = vector.load %arg1[%c5, %c0_18, %c0_19] : memref<8x8x32xf32, #tpu.memory_space<vmem>>, vector<1x8x32xf32>
    %36 = vector.shape_cast %35 : vector<1x8x32xf32> to vector<8x32xf32>
    %37 = arith.truncf %36 : vector<8x32xf32> to vector<8x32xbf16>
    %cst_20 = arith.constant dense<0.000000e+00> : vector<8x128xf32>
    %38 = tpu.matmul %37, %1, %cst_20 {dimension_numbers = #tpu.dot_dimension_numbers<[1], [0], [0], [1], [0, 0, 1, 1], [], []>} : vector<8x32xbf16>, vector<32x128xbf16>, vector<8x128xf32> -> vector<8x128xf32>
    %39 = vector.broadcast %4 : vector<1x128xf32> to vector<8x128xf32>
    %40 = arith.addf %38, %39 : vector<8x128xf32>
    %c6 = arith.constant 6 : index
    %c0_21 = arith.constant 0 : index
    %c0_22 = arith.constant 0 : index
    %41 = vector.load %arg1[%c6, %c0_21, %c0_22] : memref<8x8x32xf32, #tpu.memory_space<vmem>>, vector<1x8x32xf32>
    %42 = vector.shape_cast %41 : vector<1x8x32xf32> to vector<8x32xf32>
    %43 = arith.truncf %42 : vector<8x32xf32> to vector<8x32xbf16>
    %cst_23 = arith.constant dense<0.000000e+00> : vector<8x128xf32>
    %44 = tpu.matmul %43, %1, %cst_23 {dimension_numbers = #tpu.dot_dimension_numbers<[1], [0], [0], [1], [0, 0, 1, 1], [], []>} : vector<8x32xbf16>, vector<32x128xbf16>, vector<8x128xf32> -> vector<8x128xf32>
    %45 = vector.broadcast %4 : vector<1x128xf32> to vector<8x128xf32>
    %46 = arith.addf %44, %45 : vector<8x128xf32>
    %c7 = arith.constant 7 : index
    %c0_24 = arith.constant 0 : index
    %c0_25 = arith.constant 0 : index
    %47 = vector.load %arg1[%c7, %c0_24, %c0_25] : memref<8x8x32xf32, #tpu.memory_space<vmem>>, vector<1x8x32xf32>
    %48 = vector.shape_cast %47 : vector<1x8x32xf32> to vector<8x32xf32>
    %49 = arith.truncf %48 : vector<8x32xf32> to vector<8x32xbf16>
    %cst_26 = arith.constant dense<0.000000e+00> : vector<8x128xf32>
    %50 = tpu.matmul %49, %1, %cst_26 {dimension_numbers = #tpu.dot_dimension_numbers<[1], [0], [0], [1], [0, 0, 1, 1], [], []>} : vector<8x32xbf16>, vector<32x128xbf16>, vector<8x128xf32> -> vector<8x128xf32>
    %51 = vector.broadcast %4 : vector<1x128xf32> to vector<8x128xf32>
    %52 = arith.addf %50, %51 : vector<8x128xf32>
    %cst_27 = arith.constant 0.000000e+00 : f32
    %53 = vector.broadcast %cst_27 : f32 to vector<8x32xf32>
    %cst_28 = arith.constant 0.000000e+00 : f32
    %54 = vector.broadcast %cst_28 : f32 to vector<8x32xf32>
    %cst_29 = arith.constant 0.000000e+00 : f32
    %55 = vector.broadcast %cst_29 : f32 to vector<8x32xf32>
    %56 = arith.truncf %53 : vector<8x32xf32> to vector<8x32xbf16>
    %cst_30 = arith.constant dense<0.000000e+00> : vector<8x128xf32>
    %57 = tpu.matmul %56, %3, %cst_30 {dimension_numbers = #tpu.dot_dimension_numbers<[1], [0], [0], [1], [0, 0, 1, 1], [], []>} : vector<8x32xbf16>, vector<32x128xbf16>, vector<8x128xf32> -> vector<8x128xf32>
    %58 = arith.addf %10, %57 : vector<8x128xf32>
    %59 = arith.negf %58 : vector<8x128xf32>
    %60 = math.exp %59 : vector<8x128xf32>
    %cst_31 = arith.constant 1.000000e+00 : f32
    %61 = vector.broadcast %cst_31 : f32 to vector<8x128xf32>
    %62 = arith.addf %61, %60 : vector<8x128xf32>
    %63 = arith.divf %61, %62 : vector<8x128xf32>
    %64 = math.tanh %58 : vector<8x128xf32>
    %65 = vector.extract_strided_slice %63 {offsets = [0, 0], sizes = [8, 32], strides = [1, 1]} : vector<8x128xf32> to vector<8x32xf32>
    %66 = vector.extract_strided_slice %63 {offsets = [0, 32], sizes = [8, 32], strides = [1, 1]} : vector<8x128xf32> to vector<8x32xf32>
    %67 = vector.extract_strided_slice %64 {offsets = [0, 64], sizes = [8, 32], strides = [1, 1]} : vector<8x128xf32> to vector<8x32xf32>
    %68 = vector.extract_strided_slice %63 {offsets = [0, 96], sizes = [8, 32], strides = [1, 1]} : vector<8x128xf32> to vector<8x32xf32>
    %69 = arith.mulf %66, %54 : vector<8x32xf32>
    %70 = arith.mulf %65, %67 : vector<8x32xf32>
    %71 = arith.addf %69, %70 : vector<8x32xf32>
    %72 = math.tanh %71 : vector<8x32xf32>
    %73 = arith.mulf %68, %72 : vector<8x32xf32>
    %74 = arith.addf %55, %73 : vector<8x32xf32>
    %75 = arith.truncf %73 : vector<8x32xf32> to vector<8x32xbf16>
    %cst_32 = arith.constant dense<0.000000e+00> : vector<8x128xf32>
    %76 = tpu.matmul %75, %3, %cst_32 {dimension_numbers = #tpu.dot_dimension_numbers<[1], [0], [0], [1], [0, 0, 1, 1], [], []>} : vector<8x32xbf16>, vector<32x128xbf16>, vector<8x128xf32> -> vector<8x128xf32>
    %77 = arith.addf %16, %76 : vector<8x128xf32>
    %78 = arith.negf %77 : vector<8x128xf32>
    %79 = math.exp %78 : vector<8x128xf32>
    %cst_33 = arith.constant 1.000000e+00 : f32
    %80 = vector.broadcast %cst_33 : f32 to vector<8x128xf32>
    %81 = arith.addf %80, %79 : vector<8x128xf32>
    %82 = arith.divf %80, %81 : vector<8x128xf32>
    %83 = math.tanh %77 : vector<8x128xf32>
    %84 = vector.extract_strided_slice %82 {offsets = [0, 0], sizes = [8, 32], strides = [1, 1]} : vector<8x128xf32> to vector<8x32xf32>
    %85 = vector.extract_strided_slice %82 {offsets = [0, 32], sizes = [8, 32], strides = [1, 1]} : vector<8x128xf32> to vector<8x32xf32>
    %86 = vector.extract_strided_slice %83 {offsets = [0, 64], sizes = [8, 32], strides = [1, 1]} : vector<8x128xf32> to vector<8x32xf32>
    %87 = vector.extract_strided_slice %82 {offsets = [0, 96], sizes = [8, 32], strides = [1, 1]} : vector<8x128xf32> to vector<8x32xf32>
    %88 = arith.mulf %85, %71 : vector<8x32xf32>
    %89 = arith.mulf %84, %86 : vector<8x32xf32>
    %90 = arith.addf %88, %89 : vector<8x32xf32>
    %91 = math.tanh %90 : vector<8x32xf32>
    %92 = arith.mulf %87, %91 : vector<8x32xf32>
    %93 = arith.addf %74, %92 : vector<8x32xf32>
    %94 = arith.truncf %92 : vector<8x32xf32> to vector<8x32xbf16>
    %cst_34 = arith.constant dense<0.000000e+00> : vector<8x128xf32>
    %95 = tpu.matmul %94, %3, %cst_34 {dimension_numbers = #tpu.dot_dimension_numbers<[1], [0], [0], [1], [0, 0, 1, 1], [], []>} : vector<8x32xbf16>, vector<32x128xbf16>, vector<8x128xf32> -> vector<8x128xf32>
    %96 = arith.addf %22, %95 : vector<8x128xf32>
    %97 = arith.negf %96 : vector<8x128xf32>
    %98 = math.exp %97 : vector<8x128xf32>
    %cst_35 = arith.constant 1.000000e+00 : f32
    %99 = vector.broadcast %cst_35 : f32 to vector<8x128xf32>
    %100 = arith.addf %99, %98 : vector<8x128xf32>
    %101 = arith.divf %99, %100 : vector<8x128xf32>
    %102 = math.tanh %96 : vector<8x128xf32>
    %103 = vector.extract_strided_slice %101 {offsets = [0, 0], sizes = [8, 32], strides = [1, 1]} : vector<8x128xf32> to vector<8x32xf32>
    %104 = vector.extract_strided_slice %101 {offsets = [0, 32], sizes = [8, 32], strides = [1, 1]} : vector<8x128xf32> to vector<8x32xf32>
    %105 = vector.extract_strided_slice %102 {offsets = [0, 64], sizes = [8, 32], strides = [1, 1]} : vector<8x128xf32> to vector<8x32xf32>
    %106 = vector.extract_strided_slice %101 {offsets = [0, 96], sizes = [8, 32], strides = [1, 1]} : vector<8x128xf32> to vector<8x32xf32>
    %107 = arith.mulf %104, %90 : vector<8x32xf32>
    %108 = arith.mulf %103, %105 : vector<8x32xf32>
    %109 = arith.addf %107, %108 : vector<8x32xf32>
    %110 = math.tanh %109 : vector<8x32xf32>
    %111 = arith.mulf %106, %110 : vector<8x32xf32>
    %112 = arith.addf %93, %111 : vector<8x32xf32>
    %113 = arith.truncf %111 : vector<8x32xf32> to vector<8x32xbf16>
    %cst_36 = arith.constant dense<0.000000e+00> : vector<8x128xf32>
    %114 = tpu.matmul %113, %3, %cst_36 {dimension_numbers = #tpu.dot_dimension_numbers<[1], [0], [0], [1], [0, 0, 1, 1], [], []>} : vector<8x32xbf16>, vector<32x128xbf16>, vector<8x128xf32> -> vector<8x128xf32>
    %115 = arith.addf %28, %114 : vector<8x128xf32>
    %116 = arith.negf %115 : vector<8x128xf32>
    %117 = math.exp %116 : vector<8x128xf32>
    %cst_37 = arith.constant 1.000000e+00 : f32
    %118 = vector.broadcast %cst_37 : f32 to vector<8x128xf32>
    %119 = arith.addf %118, %117 : vector<8x128xf32>
    %120 = arith.divf %118, %119 : vector<8x128xf32>
    %121 = math.tanh %115 : vector<8x128xf32>
    %122 = vector.extract_strided_slice %120 {offsets = [0, 0], sizes = [8, 32], strides = [1, 1]} : vector<8x128xf32> to vector<8x32xf32>
    %123 = vector.extract_strided_slice %120 {offsets = [0, 32], sizes = [8, 32], strides = [1, 1]} : vector<8x128xf32> to vector<8x32xf32>
    %124 = vector.extract_strided_slice %121 {offsets = [0, 64], sizes = [8, 32], strides = [1, 1]} : vector<8x128xf32> to vector<8x32xf32>
    %125 = vector.extract_strided_slice %120 {offsets = [0, 96], sizes = [8, 32], strides = [1, 1]} : vector<8x128xf32> to vector<8x32xf32>
    %126 = arith.mulf %123, %109 : vector<8x32xf32>
    %127 = arith.mulf %122, %124 : vector<8x32xf32>
    %128 = arith.addf %126, %127 : vector<8x32xf32>
    %129 = math.tanh %128 : vector<8x32xf32>
    %130 = arith.mulf %125, %129 : vector<8x32xf32>
    %131 = arith.addf %112, %130 : vector<8x32xf32>
    %132 = arith.truncf %130 : vector<8x32xf32> to vector<8x32xbf16>
    %cst_38 = arith.constant dense<0.000000e+00> : vector<8x128xf32>
    %133 = tpu.matmul %132, %3, %cst_38 {dimension_numbers = #tpu.dot_dimension_numbers<[1], [0], [0], [1], [0, 0, 1, 1], [], []>} : vector<8x32xbf16>, vector<32x128xbf16>, vector<8x128xf32> -> vector<8x128xf32>
    %134 = arith.addf %34, %133 : vector<8x128xf32>
    %135 = arith.negf %134 : vector<8x128xf32>
    %136 = math.exp %135 : vector<8x128xf32>
    %cst_39 = arith.constant 1.000000e+00 : f32
    %137 = vector.broadcast %cst_39 : f32 to vector<8x128xf32>
    %138 = arith.addf %137, %136 : vector<8x128xf32>
    %139 = arith.divf %137, %138 : vector<8x128xf32>
    %140 = math.tanh %134 : vector<8x128xf32>
    %141 = vector.extract_strided_slice %139 {offsets = [0, 0], sizes = [8, 32], strides = [1, 1]} : vector<8x128xf32> to vector<8x32xf32>
    %142 = vector.extract_strided_slice %139 {offsets = [0, 32], sizes = [8, 32], strides = [1, 1]} : vector<8x128xf32> to vector<8x32xf32>
    %143 = vector.extract_strided_slice %140 {offsets = [0, 64], sizes = [8, 32], strides = [1, 1]} : vector<8x128xf32> to vector<8x32xf32>
    %144 = vector.extract_strided_slice %139 {offsets = [0, 96], sizes = [8, 32], strides = [1, 1]} : vector<8x128xf32> to vector<8x32xf32>
    %145 = arith.mulf %142, %128 : vector<8x32xf32>
    %146 = arith.mulf %141, %143 : vector<8x32xf32>
    %147 = arith.addf %145, %146 : vector<8x32xf32>
    %148 = math.tanh %147 : vector<8x32xf32>
    %149 = arith.mulf %144, %148 : vector<8x32xf32>
    %150 = arith.addf %131, %149 : vector<8x32xf32>
    %151 = arith.truncf %149 : vector<8x32xf32> to vector<8x32xbf16>
    %cst_40 = arith.constant dense<0.000000e+00> : vector<8x128xf32>
    %152 = tpu.matmul %151, %3, %cst_40 {dimension_numbers = #tpu.dot_dimension_numbers<[1], [0], [0], [1], [0, 0, 1, 1], [], []>} : vector<8x32xbf16>, vector<32x128xbf16>, vector<8x128xf32> -> vector<8x128xf32>
    %153 = arith.addf %40, %152 : vector<8x128xf32>
    %154 = arith.negf %153 : vector<8x128xf32>
    %155 = math.exp %154 : vector<8x128xf32>
    %cst_41 = arith.constant 1.000000e+00 : f32
    %156 = vector.broadcast %cst_41 : f32 to vector<8x128xf32>
    %157 = arith.addf %156, %155 : vector<8x128xf32>
    %158 = arith.divf %156, %157 : vector<8x128xf32>
    %159 = math.tanh %153 : vector<8x128xf32>
    %160 = vector.extract_strided_slice %158 {offsets = [0, 0], sizes = [8, 32], strides = [1, 1]} : vector<8x128xf32> to vector<8x32xf32>
    %161 = vector.extract_strided_slice %158 {offsets = [0, 32], sizes = [8, 32], strides = [1, 1]} : vector<8x128xf32> to vector<8x32xf32>
    %162 = vector.extract_strided_slice %159 {offsets = [0, 64], sizes = [8, 32], strides = [1, 1]} : vector<8x128xf32> to vector<8x32xf32>
    %163 = vector.extract_strided_slice %158 {offsets = [0, 96], sizes = [8, 32], strides = [1, 1]} : vector<8x128xf32> to vector<8x32xf32>
    %164 = arith.mulf %161, %147 : vector<8x32xf32>
    %165 = arith.mulf %160, %162 : vector<8x32xf32>
    %166 = arith.addf %164, %165 : vector<8x32xf32>
    %167 = math.tanh %166 : vector<8x32xf32>
    %168 = arith.mulf %163, %167 : vector<8x32xf32>
    %169 = arith.addf %150, %168 : vector<8x32xf32>
    %170 = arith.truncf %168 : vector<8x32xf32> to vector<8x32xbf16>
    %cst_42 = arith.constant dense<0.000000e+00> : vector<8x128xf32>
    %171 = tpu.matmul %170, %3, %cst_42 {dimension_numbers = #tpu.dot_dimension_numbers<[1], [0], [0], [1], [0, 0, 1, 1], [], []>} : vector<8x32xbf16>, vector<32x128xbf16>, vector<8x128xf32> -> vector<8x128xf32>
    %172 = arith.addf %46, %171 : vector<8x128xf32>
    %173 = arith.negf %172 : vector<8x128xf32>
    %174 = math.exp %173 : vector<8x128xf32>
    %cst_43 = arith.constant 1.000000e+00 : f32
    %175 = vector.broadcast %cst_43 : f32 to vector<8x128xf32>
    %176 = arith.addf %175, %174 : vector<8x128xf32>
    %177 = arith.divf %175, %176 : vector<8x128xf32>
    %178 = math.tanh %172 : vector<8x128xf32>
    %179 = vector.extract_strided_slice %177 {offsets = [0, 0], sizes = [8, 32], strides = [1, 1]} : vector<8x128xf32> to vector<8x32xf32>
    %180 = vector.extract_strided_slice %177 {offsets = [0, 32], sizes = [8, 32], strides = [1, 1]} : vector<8x128xf32> to vector<8x32xf32>
    %181 = vector.extract_strided_slice %178 {offsets = [0, 64], sizes = [8, 32], strides = [1, 1]} : vector<8x128xf32> to vector<8x32xf32>
    %182 = vector.extract_strided_slice %177 {offsets = [0, 96], sizes = [8, 32], strides = [1, 1]} : vector<8x128xf32> to vector<8x32xf32>
    %183 = arith.mulf %180, %166 : vector<8x32xf32>
    %184 = arith.mulf %179, %181 : vector<8x32xf32>
    %185 = arith.addf %183, %184 : vector<8x32xf32>
    %186 = math.tanh %185 : vector<8x32xf32>
    %187 = arith.mulf %182, %186 : vector<8x32xf32>
    %188 = arith.addf %169, %187 : vector<8x32xf32>
    %189 = arith.truncf %187 : vector<8x32xf32> to vector<8x32xbf16>
    %cst_44 = arith.constant dense<0.000000e+00> : vector<8x128xf32>
    %190 = tpu.matmul %189, %3, %cst_44 {dimension_numbers = #tpu.dot_dimension_numbers<[1], [0], [0], [1], [0, 0, 1, 1], [], []>} : vector<8x32xbf16>, vector<32x128xbf16>, vector<8x128xf32> -> vector<8x128xf32>
    %191 = arith.addf %52, %190 : vector<8x128xf32>
    %192 = arith.negf %191 : vector<8x128xf32>
    %193 = math.exp %192 : vector<8x128xf32>
    %cst_45 = arith.constant 1.000000e+00 : f32
    %194 = vector.broadcast %cst_45 : f32 to vector<8x128xf32>
    %195 = arith.addf %194, %193 : vector<8x128xf32>
    %196 = arith.divf %194, %195 : vector<8x128xf32>
    %197 = math.tanh %191 : vector<8x128xf32>
    %198 = vector.extract_strided_slice %196 {offsets = [0, 0], sizes = [8, 32], strides = [1, 1]} : vector<8x128xf32> to vector<8x32xf32>
    %199 = vector.extract_strided_slice %196 {offsets = [0, 32], sizes = [8, 32], strides = [1, 1]} : vector<8x128xf32> to vector<8x32xf32>
    %200 = vector.extract_strided_slice %197 {offsets = [0, 64], sizes = [8, 32], strides = [1, 1]} : vector<8x128xf32> to vector<8x32xf32>
    %201 = vector.extract_strided_slice %196 {offsets = [0, 96], sizes = [8, 32], strides = [1, 1]} : vector<8x128xf32> to vector<8x32xf32>
    %202 = arith.mulf %199, %185 : vector<8x32xf32>
    %203 = arith.mulf %198, %200 : vector<8x32xf32>
    %204 = arith.addf %202, %203 : vector<8x32xf32>
    %205 = math.tanh %204 : vector<8x32xf32>
    %206 = arith.mulf %201, %205 : vector<8x32xf32>
    %207 = arith.addf %188, %206 : vector<8x32xf32>
    %c0_46 = arith.constant 0 : index
    %c0_47 = arith.constant 0 : index
    %208 = vector.load %arg3[%c0_46, %c0_47] : memref<33x128xf32, #tpu.memory_space<vmem>>, vector<32x128xf32>
    %209 = arith.truncf %208 : vector<32x128xf32> to vector<32x128xbf16>
    %c32_48 = arith.constant 32 : index
    %c0_49 = arith.constant 0 : index
    %210 = vector.load %arg3[%c32_48, %c0_49] : memref<33x128xf32, #tpu.memory_space<vmem>>, vector<1x128xf32>
    %211 = arith.truncf %207 : vector<8x32xf32> to vector<8x32xbf16>
    %cst_50 = arith.constant dense<0.000000e+00> : vector<8x128xf32>
    %212 = tpu.matmul %211, %209, %cst_50 {dimension_numbers = #tpu.dot_dimension_numbers<[1], [0], [0], [1], [0, 0, 1, 1], [], []>} : vector<8x32xbf16>, vector<32x128xbf16>, vector<8x128xf32> -> vector<8x128xf32>
    %213 = vector.broadcast %210 : vector<1x128xf32> to vector<8x128xf32>
    %214 = arith.addf %212, %213 : vector<8x128xf32>
    %c0_51 = arith.constant 0 : index
    %c0_52 = arith.constant 0 : index
    %215 = vector.load %arg4[%c0_51, %c0_52] : memref<8x128xf32, #tpu.memory_space<vmem>>, vector<8x128xf32>
    tpu.vector_store %arg4[%c0_51, %c0_52], %214 {strides = array<i32>} : memref<8x128xf32, #tpu.memory_space<vmem>>, vector<8x128xf32>,
    return
  }
  func.func @transform_0(%arg0: i32) -> (i32, i32, i32) {
    %c0_i32 = arith.constant 0 : i32
    %c0_i32_0 = arith.constant 0 : i32
    %c0_i32_1 = arith.constant 0 : i32
    return %c0_i32, %arg0, %c0_i32_0 : i32, i32, i32
  }
  func.func @transform_1(%arg0: i32) -> (i32, i32) {
    %c0_i32 = arith.constant 0 : i32
    %c0_i32_0 = arith.constant 0 : i32
    %c0_i32_1 = arith.constant 0 : i32
    return %c0_i32, %c0_i32_0 : i32, i32
  }
  func.func @transform_2(%arg0: i32) -> (i32, i32) {
    %c0_i32 = arith.constant 0 : i32
    %c0_i32_0 = arith.constant 0 : i32
    %c0_i32_1 = arith.constant 0 : i32
    return %c0_i32, %c0_i32_0 : i32, i32
  }
  func.func @transform_3(%arg0: i32) -> (i32, i32) {
    %c0_i32 = arith.constant 0 : i32
    %c0_i32_0 = arith.constant 0 : i32
    return %arg0, %c0_i32 : i32, i32
  }
}

</mosaic_0001>

<llo_original>
// kernel: forward_batch.1
$region0: #{forward_batch.1}
  #allocation0 [shape = 'u32[]', space=smem, size = 0x4, offset = 0x4, fixed_abs, tag = 'smem constant byte address 0x4 - core index']
  #allocation1 [shape = 'u32[72,128]{1,0:T(1,128)}', space=vmem, size = 0x9000, scoped, tag = 'internal scratch']
  %s0 = inlined_call_operand.vmem [shape: f32[8,16,32], index: 0, kind: input, shape index: {}]
  %s1 = inlined_call_operand.vmem [shape: f32[65,128], index: 1, kind: input, shape index: {}]
  %s2 = inlined_call_operand.vmem [shape: f32[33,128], index: 2, kind: input, shape index: {}]
  %s3 = inlined_call_operand.vmem [shape: f32[16,128], index: 3, kind: output, shape index: {}]
  %s4 = sld [smem:[#allocation0]]
  $region83: #{forward_batch.1} parent=0
    _
  %s6 = ssub.s32 1, %s4
  %s7 = scalar_select 0, %s6, %s4
  $region1: #{forward_batch.1} parent=0
    #allocation2 [shape = 'u8[65536]{0}', space=vmem, size = 0x10000, scoped, tag = 'input window, operand 0']
    loop: start=0, step=1, limit=4
    $region2: #{forward_batch.1} parent=1 // loop_pre_header
      _
    $region3: #{forward_batch.1} parent=1 // loop_header
      %s9 = sphi 0, %s13
      %p10 = scmp.ge.s32.totalorder %s9, 4
      %s19 = sphi 0, %s21
      %s22 = sphi 0, %s19
      %s23 = sphi 0, %s22
      %s39 = sphi 0, %s23
      %s43 = sphi 0, %s43
      %s45 = sphi 0, %s43
      %s46 = sphi 0, %s45
      %s60 = sphi 0, %s46
      %s64 = sphi 0, %s64
      %s66 = sphi 0, %s64
      %s67 = sphi 0, %s66
      %s81 = sphi 0, %s67
      %s87 = sphi 0, %s89
      %s90 = sphi 0, %s87
      %s91 = sphi 0, %s90
      %s107 = sphi 0, %s91
    $region4: #{forward_batch.1} parent=1 // loop_header_branch
      %12 = sbr.rel (%p10) target = $region8
    $region5: #{forward_batch.1} parent=1 // loop_body
      %s14 = ssub.s32 %s9, 1
      %s15 = ssub.s32 %s9, 2
      %s16 = sadd.s32 %s9, 1
      %s17 = ssub.s32 %s9, %s16
      %p18 = scmp.eq.s32.totalorder %s17, 0
      %s20 = sadd.s32 %s19, 1
      %s21 = scalar_select %p18, %s19, %s20
      %p24 = pneg %p18
      %p25 = scmp.eq.s32.totalorder %s9, 1
      %p26 = por %p24, %p25
      %p27 = scmp.ne.s32.totalorder %s19, %s22
      %p28 = scmp.eq.s32.totalorder %s9, 0
      %p29 = por %p27, %p28
      %p30 = scmp.ne.s32.totalorder %s19, %s22
      %p31 = scmp.eq.s32.totalorder %s14, 1
      %p32 = por %p30, %p31
      %p33 = scmp.ne.s32.totalorder %s22, %s23
      %p34 = scmp.eq.s32.totalorder %s14, 0
      %p35 = por %p33, %p34
      %p36 = scmp.ne.s32.totalorder %s22, %s23
      %p37 = scmp.eq.s32.totalorder %s15, 1
      %p38 = por %p36, %p37
      %p40 = scmp.ne.s32.totalorder %s23, %s39
      %p41 = scmp.eq.s32.totalorder %s15, 0
      %p42 = por %p40, %p41
      %s44 = sadd.s32 %s43, 1
      %p47 = scmp.eq.s32.totalorder %s9, 1
      %p48 = scmp.ne.s32.totalorder %s43, %s45
      %p49 = scmp.eq.s32.totalorder %s9, 0
      %p50 = por %p48, %p49
      %p51 = scmp.ne.s32.totalorder %s43, %s45
      %p52 = scmp.eq.s32.totalorder %s14, 1
      %p53 = por %p51, %p52
      %p54 = scmp.ne.s32.totalorder %s45, %s46
      %p55 = scmp.eq.s32.totalorder %s14, 0
      %p56 = por %p54, %p55
      %p57 = scmp.ne.s32.totalorder %s45, %s46
      %p58 = scmp.eq.s32.totalorder %s15, 1
      %p59 = por %p57, %p58
      %p61 = scmp.ne.s32.totalorder %s46, %s60
      %p62 = scmp.eq.s32.totalorder %s15, 0
      %p63 = por %p61, %p62
      %s65 = sadd.s32 %s64, 1
      %p68 = scmp.eq.s32.totalorder %s9, 1
      %p69 = scmp.ne.s32.totalorder %s64, %s66
      %p70 = scmp.eq.s32.totalorder %s9, 0
      %p71 = por %p69, %p70
      %p72 = scmp.ne.s32.totalorder %s64, %s66
      %p73 = scmp.eq.s32.totalorder %s14, 1
      %p74 = por %p72, %p73
      %p75 = scmp.ne.s32.totalorder %s66, %s67
      %p76 = scmp.eq.s32.totalorder %s14, 0
      %p77 = por %p75, %p76
      %p78 = scmp.ne.s32.totalorder %s66, %s67
      %p79 = scmp.eq.s32.totalorder %s15, 1
      %p80 = por %p78, %p79
      %p82 = scmp.ne.s32.totalorder %s67, %s81
      %p83 = scmp.eq.s32.totalorder %s15, 0
      %p84 = por %p82, %p83
      %s85 = ssub.s32 %s9, %s16
      %p86 = scmp.eq.s32.totalorder %s85, 0
      %s88 = sadd.s32 %s87, 1
      %s89 = scalar_select %p86, %s87, %s88
      %p92 = pneg %p86
      %p93 = scmp.eq.s32.totalorder %s9, 1
      %p94 = por %p92, %p93
      %p95 = scmp.ne.s32.totalorder %s87, %s90
      %p96 = scmp.eq.s32.totalorder %s9, 0
      %p97 = por %p95, %p96
      %p98 = scmp.ne.s32.totalorder %s87, %s90
      %p99 = scmp.eq.s32.totalorder %s14, 1
      %p100 = por %p98, %p99
      %p101 = scmp.ne.s32.totalorder %s90, %s91
      %p102 = scmp.eq.s32.totalorder %s14, 0
      %p103 = por %p101, %p102
      %p104 = scmp.ne.s32.totalorder %s90, %s91
      %p105 = scmp.eq.s32.totalorder %s15, 1
      %p106 = por %p104, %p105
      %p108 = scmp.ne.s32.totalorder %s91, %s107
      %p109 = scmp.eq.s32.totalorder %s15, 0
      %p110 = por %p108, %p109
      %p111 = scmp.le.s32.totalorder 1, %s9
      %p112 = scmp.lt.s32.totalorder %s9, 3
      %p113 = pnand %p111, %p112
      %p114 = pneg %p113
      // Predicated region
      $region9: #{forward_batch.1} parent=5 // pred_check
        _
      $region10: #{forward_batch.1} parent=5 // pred_check_branch
        %116 = sbr.rel (%p113) target = $region12
      $region11: #{forward_batch.1} parent=5 // pred_region
        %s117 = ssub.s32 %s9, 1
        // Predicated region
        $region13: #{forward_batch.1} parent=11 // pred_check
          %p118 = pneg %p56
        $region14: #{forward_batch.1} parent=11 // pred_check_branch
          %120 = sbr.rel (%p118) target = $region16
        $region15: #{forward_batch.1} parent=11 // pred_region
          _
        $region16: #{forward_batch.1} parent=11 // pred_fallthru
          _
        // Predicated region
        $region17: #{forward_batch.1} parent=11 // pred_check
          %p121 = pneg %p77
        $region18: #{forward_batch.1} parent=11 // pred_check_branch
          %123 = sbr.rel (%p121) target = $region20
        $region19: #{forward_batch.1} parent=11 // pred_region
          _
        $region20: #{forward_batch.1} parent=11 // pred_fallthru
          _
      $region12: #{forward_batch.1} parent=5 // pred_fallthru
        _
      %p124 = scmp.lt.s32.totalorder %s9, 2
      // Predicated region
      $region21: #{forward_batch.1} parent=5 // pred_check
        %p125 = pneg %p124
      $region22: #{forward_batch.1} parent=5 // pred_check_branch
        %127 = sbr.rel (%p125) target = $region24
      $region23: #{forward_batch.1} parent=5 // pred_region
        // Predicated region
        $region25: #{forward_batch.1} parent=23 // pred_check
          %p128 = pneg %p29
        $region26: #{forward_batch.1} parent=23 // pred_check_branch
          %130 = sbr.rel (%p128) target = $region28
        $region27: #{forward_batch.1} parent=23 // pred_region
          %s131 = sand.u32 %s19, 1
          %s132 = sand.u32 %s19, 1
          %s133 = smul.addr %s132, 64
          %s134 = scalar_lea.vmem [#allocation2], %s133
          %s135 = smul.addr %s9, 8
          %s136 = scalar_lea.vmem %s0, %s135
          // Predicated region
          $region29: #{forward_batch.1} parent=27 // pred_check
            _
          $region30: #{forward_batch.1} parent=27 // pred_check_branch
            %138 = sbr.rel (0) target = $region32
          $region31: #{forward_batch.1} parent=27 // pred_region
            // Predicated region
            $region33: #{forward_batch.1} parent=31 // pred_check
              _
            $region34: #{forward_batch.1} parent=31 // pred_check_branch
              %140 = sbr.rel (0) target = $region36
            $region35: #{forward_batch.1} parent=31 // pred_region
              // Predicated region
              $region48: #{forward_batch.1} parent=35 // pred_check
                _
              $region49: #{forward_batch.1} parent=35 // pred_check_branch
                %170 = sbr.rel (0) target = $region51
              $region50: #{forward_batch.1} parent=35 // pred_region
                loop: start=0, step=1, limit=1
                $region52: #{forward_batch.1} parent=50 // loop_pre_header
                  _
                $region53: #{forward_batch.1} parent=50 // loop_header
                  %s172 = sphi 0, %s176
                  %p173 = scmp.ge.s32.totalorder %s172, 1
                  %s177 = sphi %s136, %s136
                  %s178 = sphi %s134, %s134
                $region54: #{forward_batch.1} parent=50 // loop_header_branch
                  %175 = sbr.rel (%p173) target = $region58
                $region55: #{forward_batch.1} parent=50 // loop_body
                  %v179 = vld [vmem:[%s177] sm:$0xff]
                  %180 = vst [vmem:[%s178] sm:$0xff] %v179
                  %v181 = vld [vmem:[%s177 + $0x10] sm:$0xff]
                  %182 = vst [vmem:[%s178 + $0x8] sm:$0xff] %v181
                  %v183 = vld [vmem:[%s177 + $0x20] sm:$0xff]
                  %184 = vst [vmem:[%s178 + $0x10] sm:$0xff] %v183
                  %v185 = vld [vmem:[%s177 + $0x30] sm:$0xff]
                  %186 = vst [vmem:[%s178 + $0x18] sm:$0xff] %v185
                  %v187 = vld [vmem:[%s177 + $0x40] sm:$0xff]
                  %188 = vst [vmem:[%s178 + $0x20] sm:$0xff] %v187
                  %v189 = vld [vmem:[%s177 + $0x50] sm:$0xff]
                  %190 = vst [vmem:[%s178 + $0x28] sm:$0xff] %v189
                  %v191 = vld [vmem:[%s177 + $0x60] sm:$0xff]
                  %192 = vst [vmem:[%s178 + $0x30] sm:$0xff] %v191
                  %v193 = vld [vmem:[%s177 + $0x70] sm:$0xff]
                  %194 = vst [vmem:[%s178 + $0x38] sm:$0xff] %v193
                $region56: #{forward_batch.1} parent=50 // loop_footer
                  %s176 = sadd.s32 1, %s172
                $region57: #{forward_batch.1} parent=50 // loop_footer_branch
                  %171 = sbr.rel target = $region53
                $region58: #{forward_batch.1} parent=50 // loop_exit
                  _
              $region51: #{forward_batch.1} parent=35 // pred_fallthru
                _
              // Predicated region
              $region59: #{forward_batch.1} parent=35 // pred_check
                _
              $region60: #{forward_batch.1} parent=35 // pred_check_branch
                %196 = sbr.rel target = $region62
              $region61: #{forward_batch.1} parent=35 // pred_region
                _
              $region62: #{forward_batch.1} parent=35 // pred_fallthru
                _
            $region36: #{forward_batch.1} parent=31 // pred_fallthru
              _
            // Predicated region
            $region37: #{forward_batch.1} parent=31 // pred_check
              _
            $region38: #{forward_batch.1} parent=31 // pred_check_branch
              %142 = sbr.rel target = $region40
            $region39: #{forward_batch.1} parent=31 // pred_region
              %s144 = ssub.s32 256, 1
              loop: start=0, step=1, limit=1
              $region41: #{forward_batch.1} parent=39 // loop_pre_header
                _
              $region42: #{forward_batch.1} parent=39 // loop_header
                %s146 = sphi 0, %s150
                %p147 = scmp.ge.s32.totalorder %s146, 1
                %s151 = sphi %s136, %s136
                %s152 = sphi %s134, %s134
              $region43: #{forward_batch.1} parent=39 // loop_header_branch
                %149 = sbr.rel (%p147) target = $region47
              $region44: #{forward_batch.1} parent=39 // loop_body
                %v153 = vld [vmem:[%s151] sm:%s144]
                %154 = vst [vmem:[%s152] sm:%s144] %v153
                %v155 = vld [vmem:[%s151 + $0x10] sm:%s144]
                %156 = vst [vmem:[%s152 + $0x8] sm:%s144] %v155
                %v157 = vld [vmem:[%s151 + $0x20] sm:%s144]
                %158 = vst [vmem:[%s152 + $0x10] sm:%s144] %v157
                %v159 = vld [vmem:[%s151 + $0x30] sm:%s144]
                %160 = vst [vmem:[%s152 + $0x18] sm:%s144] %v159
                %v161 = vld [vmem:[%s151 + $0x40] sm:%s144]
                %162 = vst [vmem:[%s152 + $0x20] sm:%s144] %v161
                %v163 = vld [vmem:[%s151 + $0x50] sm:%s144]
                %164 = vst [vmem:[%s152 + $0x28] sm:%s144] %v163
                %v165 = vld [vmem:[%s151 + $0x60] sm:%s144]
                %166 = vst [vmem:[%s152 + $0x30] sm:%s144] %v165
                %v167 = vld [vmem:[%s151 + $0x70] sm:%s144]
                %168 = vst [vmem:[%s152 + $0x38] sm:%s144] %v167
              $region45: #{forward_batch.1} parent=39 // loop_footer
                %s150 = sadd.s32 1, %s146
              $region46: #{forward_batch.1} parent=39 // loop_footer_branch
                %145 = sbr.rel target = $region42
              $region47: #{forward_batch.1} parent=39 // loop_exit
                _
            $region40: #{forward_batch.1} parent=31 // pred_fallthru
              _
          $region32: #{forward_batch.1} parent=27 // pred_fallthru
            _
          %197 = vnop
        $region28: #{forward_batch.1} parent=23 // pred_fallthru
          _
      $region24: #{forward_batch.1} parent=5 // pred_fallthru
        _
      %p198 = scmp.le.s32.totalorder 1, %s9
      %p199 = scmp.lt.s32.totalorder %s9, 3
      %p200 = pnand %p198, %p199
      %p201 = pneg %p200
      // Predicated region
      $region63: #{forward_batch.1} parent=5 // pred_check
        _
      $region64: #{forward_batch.1} parent=5 // pred_check_branch
        %203 = sbr.rel (%p200) target = $region66
      $region65: #{forward_batch.1} parent=5 // pred_region
        %s204 = ssub.s32 %s9, 1
        %s205 = sand.u32 %s22, 1
        %s206 = sand.u32 %s22, 1
        %s207 = smul.addr %s206, 64
        %s208 = scalar_lea.vmem [#allocation2], %s207
        // Predicated region
        $region67: #{forward_batch.1} parent=65 // pred_check
          %p209 = pneg %p35
        $region68: #{forward_batch.1} parent=65 // pred_check_branch
          %211 = sbr.rel (%p209) target = $region70
        $region69: #{forward_batch.1} parent=65 // pred_region
          _
        $region70: #{forward_batch.1} parent=65 // pred_fallthru
          _
        %s212 = sand.u32 %s22, 1
        %s213 = sand.u32 %s22, 1
        %s214 = smul.addr %s213, 64
        %s215 = scalar_lea.vmem [#allocation2], %s214
        %p216 = pneg %p35
        %p217 = pneg %p32
        %p218 = pneg %p56
        %p219 = pneg %p53
        %p220 = pneg %p77
        %p221 = pneg %p74
        %p222 = pneg %p103
        %p223 = pneg %p100
        %p224 = scmp.lt.s32.totalorder %s14, 1
        %s225 = scalar_select %p224, %s14, 1
        %s226 = smul.addr %s225, 8
        %s227 = scalar_lea.vmem %s3, %s226
        %p228 = scmp.lt.s32.totalorder %s14, 1
        %s229 = scalar_select %p228, %s14, 1
        %s230 = smul.addr %s229, 8
        %s231 = scalar_lea.vmem %s3, %s230
        %v233 = vld [vmem:[%s1] sm:$0xff]
        %v234 = vld [vmem:[%s1 + $0x8] sm:$0xff]
        %v235 = vld [vmem:[%s1 + $0x10] sm:$0xff]
        %v236 = vld [vmem:[%s1 + $0x18] sm:$0xff]
        %v237 = vpack.c.bf16 %v234, %v233
        %v238 = vpack.c.bf16 %v236, %v235
        %v239 = vld [vmem:[%s1 + $0x20] sm:$0xff]
        %v240 = vld [vmem:[%s1 + $0x28] sm:$0xff]
        %v241 = vld [vmem:[%s1 + $0x30] sm:$0xff]
        %v242 = vld [vmem:[%s1 + $0x38] sm:$0xff]
        %v243 = vpack.c.bf16 %v240, %v239
        %v244 = vpack.c.bf16 %v242, %v241
        %v245 = vld [vmem:[%s1 + $0x40] sm:$0x1]
        %v246 = vld [vmem:[%s208] sm:$0xff]
        %v247 = vpack.c.bf16 %v246, %v246
        %v248 = vperm.slane %v245, 0
        %vm249 = vcmask 261120
        %v251 = vsel %vm249, %v247, 0
        %253 = vmatpush.bf16.msra.mxu0 0
        %254 = vmatpush.bf16.msra.mxu0 0
        %255 = vmatpush.bf16.msra.mxu0 0
        %256 = vmatpush.bf16.msra.mxu0 0
        %257 = vmatpush.bf16.msra.mxu0 0
        %258 = vmatpush.bf16.msra.mxu0 0
        %259 = vmatpush.bf16.msra.mxu0 %v238
        %260 = vmatpush.bf16.msra.mxu0 %v237
        %261 = vmatmul.bf16.gmra.mxu0 %v251
        %v262 = vpop.f32.mrf.mxu0
        %v263 = vadd.f32 %v248, %v262
        %v264 = vpop.f32.mrf.mxu0
        %265 = vdwg.mxu0
        %s266 = scalar_lea.vmem %s208, 8 [#allocation2]
        %v267 = vld [vmem:[%s266] sm:$0xff]
        %v268 = vpack.c.bf16 %v267, %v267
        %v270 = vsel %vm249, %v268, 0
        %272 = vmatpush.bf16.msra.mxu0 0
        %273 = vmatpush.bf16.msra.mxu0 0
        %274 = vmatpush.bf16.msra.mxu0 0
        %275 = vmatpush.bf16.msra.mxu0 0
        %276 = vmatpush.bf16.msra.mxu0 0
        %277 = vmatpush.bf16.msra.mxu0 0
        %278 = vmatpush.bf16.msra.mxu0 %v238
        %279 = vmatpush.bf16.msra.mxu0 %v237
        %280 = vmatmul.bf16.gmra.mxu0 %v270
        %v281 = vpop.f32.mrf.mxu0
        %v282 = vadd.f32 %v248, %v281
        %v283 = vpop.f32.mrf.mxu0
        %284 = vdwg.mxu0
        %s285 = scalar_lea.vmem %s208, 16 [#allocation2]
        %v286 = vld [vmem:[%s285] sm:$0xff]
        %v287 = vpack.c.bf16 %v286, %v286
        %v289 = vsel %vm249, %v287, 0
        %291 = vmatpush.bf16.msra.mxu0 0
        %292 = vmatpush.bf16.msra.mxu0 0
        %293 = vmatpush.bf16.msra.mxu0 0
        %294 = vmatpush.bf16.msra.mxu0 0
        %295 = vmatpush.bf16.msra.mxu0 0
        %296 = vmatpush.bf16.msra.mxu0 0
        %297 = vmatpush.bf16.msra.mxu0 %v238
        %298 = vmatpush.bf16.msra.mxu0 %v237
        %299 = vmatmul.bf16.gmra.mxu0 %v289
        %v300 = vpop.f32.mrf.mxu0
        %v301 = vadd.f32 %v248, %v300
        %v302 = vpop.f32.mrf.mxu0
        %303 = vdwg.mxu0
        %s304 = scalar_lea.vmem %s208, 24 [#allocation2]
        %v305 = vld [vmem:[%s304] sm:$0xff]
        %v306 = vpack.c.bf16 %v305, %v305
        %v308 = vsel %vm249, %v306, 0
        %310 = vmatpush.bf16.msra.mxu0 0
        %311 = vmatpush.bf16.msra.mxu0 0
        %312 = vmatpush.bf16.msra.mxu0 0
        %313 = vmatpush.bf16.msra.mxu0 0
        %314 = vmatpush.bf16.msra.mxu0 0
        %315 = vmatpush.bf16.msra.mxu0 0
        %316 = vmatpush.bf16.msra.mxu0 %v238
        %317 = vmatpush.bf16.msra.mxu0 %v237
        %318 = vmatmul.bf16.gmra.mxu0 %v308
        %v319 = vpop.f32.mrf.mxu0
        %v320 = vadd.f32 %v248, %v319
        %v321 = vpop.f32.mrf.mxu0
        %322 = vdwg.mxu0
        %s323 = scalar_lea.vmem %s208, 32 [#allocation2]
        %v324 = vld [vmem:[%s323] sm:$0xff]
        %v325 = vpack.c.bf16 %v324, %v324
        %v327 = vsel %vm249, %v325, 0
        %329 = vmatpush.bf16.msra.mxu0 0
        %330 = vmatpush.bf16.msra.mxu0 0
        %331 = vmatpush.bf16.msra.mxu0 0
        %332 = vmatpush.bf16.msra.mxu0 0
        %333 = vmatpush.bf16.msra.mxu0 0
        %334 = vmatpush.bf16.msra.mxu0 0
        %335 = vmatpush.bf16.msra.mxu0 %v238
        %336 = vmatpush.bf16.msra.mxu0 %v237
        %337 = vmatmul.bf16.gmra.mxu0 %v327
        %v338 = vpop.f32.mrf.mxu0
        %v339 = vadd.f32 %v248, %v338
        %v340 = vpop.f32.mrf.mxu0
        %341 = vdwg.mxu0
        %s342 = scalar_lea.vmem %s208, 40 [#allocation2]
        %v343 = vld [vmem:[%s342] sm:$0xff]
        %v344 = vpack.c.bf16 %v343, %v343
        %v346 = vsel %vm249, %v344, 0
        %348 = vmatpush.bf16.msra.mxu0 0
        %349 = vmatpush.bf16.msra.mxu0 0
        %350 = vmatpush.bf16.msra.mxu0 0
        %351 = vmatpush.bf16.msra.mxu0 0
        %352 = vmatpush.bf16.msra.mxu0 0
        %353 = vmatpush.bf16.msra.mxu0 0
        %354 = vmatpush.bf16.msra.mxu0 %v238
        %355 = vmatpush.bf16.msra.mxu0 %v237
        %356 = vmatmul.bf16.gmra.mxu0 %v346
        %v357 = vpop.f32.mrf.mxu0
        %v358 = vadd.f32 %v248, %v357
        %v359 = vpop.f32.mrf.mxu0
        %360 = vdwg.mxu0
        %s361 = scalar_lea.vmem %s208, 48 [#allocation2]
        %v362 = vld [vmem:[%s361] sm:$0xff]
        %v363 = vpack.c.bf16 %v362, %v362
        %v365 = vsel %vm249, %v363, 0
        %367 = vmatpush.bf16.msra.mxu0 0
        %368 = vmatpush.bf16.msra.mxu0 0
        %369 = vmatpush.bf16.msra.mxu0 0
        %370 = vmatpush.bf16.msra.mxu0 0
        %371 = vmatpush.bf16.msra.mxu0 0
        %372 = vmatpush.bf16.msra.mxu0 0
        %373 = vmatpush.bf16.msra.mxu0 %v238
        %374 = vmatpush.bf16.msra.mxu0 %v237
        %375 = vmatmul.bf16.gmra.mxu0 %v365
        %v376 = vpop.f32.mrf.mxu0
        %v377 = vadd.f32 %v248, %v376
        %v378 = vpop.f32.mrf.mxu0
        %379 = vdwg.mxu0
        %s380 = scalar_lea.vmem %s208, 56 [#allocation2]
        %v381 = vld [vmem:[%s380] sm:$0xff]
        %v382 = vpack.c.bf16 %v381, %v381
        %v384 = vsel %vm249, %v382, 0
        %386 = vmatpush.bf16.msra.mxu0 0
        %387 = vmatpush.bf16.msra.mxu0 0
        %388 = vmatpush.bf16.msra.mxu0 0
        %389 = vmatpush.bf16.msra.mxu0 0
        %390 = vmatpush.bf16.msra.mxu0 0
        %391 = vmatpush.bf16.msra.mxu0 0
        %392 = vmatpush.bf16.msra.mxu0 %v238
        %393 = vmatpush.bf16.msra.mxu0 %v237
        %394 = vmatmul.bf16.gmra.mxu0 %v384
        %v395 = vpop.f32.mrf.mxu0
        %v396 = vadd.f32 %v248, %v395
        %v397 = vpop.f32.mrf.mxu0
        %398 = vdwg.mxu0
        %v400 = vsel %vm249, 0, 0
        %402 = vmatpush.bf16.msra.mxu0 0
        %403 = vmatpush.bf16.msra.mxu0 0
        %404 = vmatpush.bf16.msra.mxu0 0
        %405 = vmatpush.bf16.msra.mxu0 0
        %406 = vmatpush.bf16.msra.mxu0 0
        %407 = vmatpush.bf16.msra.mxu0 0
        %408 = vmatpush.bf16.msra.mxu0 %v244
        %409 = vmatpush.bf16.msra.mxu0 %v243
        %410 = vmatmul.bf16.gmra.mxu0 %v400
        %v411 = vpop.f32.mrf.mxu0
        %v412 = vadd.f32 0.0, %v411
        %v413 = vpop.f32.mrf.mxu0
        %414 = vdwg.mxu0
        %v415 = vadd.f32 %v263, %v412
        %v416 = vxor.u32 %v415, 2147483648
        %v417 = vmul.f32 %v416, 1.442695
        %v418 = vpow.pop %v417
        %v419 = vadd.f32 %v418, 1.0
        %v420 = vrcp.pop %v419
        %v421 = vmul.f32 %v419, %v420
        %v422 = vsub.f32 1.0, %v421
        %v423 = vmul.f32 %v420, %v422
        %v424 = vadd.f32 %v420, %v423
        %vm425 = vweird.f32 %v419
        %vm426 = vweird.f32 %v420
        %vm427 = vmor %vm425, %vm426
        %v428 = vsel %vm427, %v420, %v424
        %v429 = vand.u32 2147483647, %v419
        %vm430 = vcmp.eq.f32.partialorder %v429, 8.507059e+37
        %v431 = vand.u32 %v419, 2147483648
        %v432 = vor.u32 1.1754944e-38, %v431
        %v433 = vsel %vm430, %v432, %v428
        %v434 = vmul.f32 1.0, %v433
        %v435 = vtanh.pop %v415
        %v436 = vmul.f32 %v434, 0.0
        %438 = vrot.lane.b32.xlu0 %v435, 64
        %v439 = vpop.permute.xlu0 %438
        %v441 = vmul.f32 %v434, %v439
        %443 = vrot.lane.b32.xlu0 %v441, 32
        %v444 = vpop.permute.xlu0 %443
        %v446 = vadd.f32 %v436, %v444
        %v447 = vtanh.pop %v446
        %449 = vrot.lane.b32.xlu0 %v447, 64
        %v450 = vpop.permute.xlu0 %449
        %v452 = vmul.f32 %v434, %v450
        %v453 = vadd.f32 %v452, 0.0
        %v454 = vpack.c.bf16 %v452, %v452
        %456 = vrot.lane.b32.xlu0 %v454, 32
        %v457 = vpop.permute.xlu0 %456
        %v459 = vsel %vm249, %v457, 0
        %461 = vmatpush.bf16.msra.mxu0 0
        %462 = vmatpush.bf16.msra.mxu0 0
        %463 = vmatpush.bf16.msra.mxu0 0
        %464 = vmatpush.bf16.msra.mxu0 0
        %465 = vmatpush.bf16.msra.mxu0 0
        %466 = vmatpush.bf16.msra.mxu0 0
        %467 = vmatpush.bf16.msra.mxu0 %v244
        %468 = vmatpush.bf16.msra.mxu0 %v243
        %469 = vmatmul.bf16.gmra.mxu0 %v459
        %v470 = vpop.f32.mrf.mxu0
        %v471 = vadd.f32 0.0, %v470
        %v472 = vpop.f32.mrf.mxu0
        %473 = vdwg.mxu0
        %v474 = vadd.f32 %v282, %v471
        %v475 = vxor.u32 %v474, 2147483648
        %v476 = vmul.f32 %v475, 1.442695
        %v477 = vpow.pop %v476
        %v478 = vadd.f32 %v477, 1.0
        %v479 = vrcp.pop %v478
        %v480 = vmul.f32 %v478, %v479
        %v481 = vsub.f32 1.0, %v480
        %v482 = vmul.f32 %v479, %v481
        %v483 = vadd.f32 %v479, %v482
        %vm484 = vweird.f32 %v478
        %vm485 = vweird.f32 %v479
        %vm486 = vmor %vm484, %vm485
        %v487 = vsel %vm486, %v479, %v483
        %v488 = vand.u32 2147483647, %v478
        %vm489 = vcmp.eq.f32.partialorder %v488, 8.507059e+37
        %v490 = vand.u32 %v478, 2147483648
        %v491 = vor.u32 1.1754944e-38, %v490
        %v492 = vsel %vm489, %v491, %v487
        %v493 = vmul.f32 1.0, %v492
        %v494 = vtanh.pop %v474
        %v495 = vmul.f32 %v493, %v446
        %497 = vrot.lane.b32.xlu0 %v494, 64
        %v498 = vpop.permute.xlu0 %497
        %v500 = vmul.f32 %v493, %v498
        %502 = vrot.lane.b32.xlu0 %v500, 32
        %v503 = vpop.permute.xlu0 %502
        %v505 = vadd.f32 %v495, %v503
        %v506 = vtanh.pop %v505
        %508 = vrot.lane.b32.xlu0 %v506, 64
        %v509 = vpop.permute.xlu0 %508
        %v511 = vmul.f32 %v493, %v509
        %v512 = vadd.f32 %v453, %v511
        %v513 = vpack.c.bf16 %v511, %v511
        %515 = vrot.lane.b32.xlu0 %v513, 32
        %v516 = vpop.permute.xlu0 %515
        %v518 = vsel %vm249, %v516, 0
        %520 = vmatpush.bf16.msra.mxu0 0
        %521 = vmatpush.bf16.msra.mxu0 0
        %522 = vmatpush.bf16.msra.mxu0 0
        %523 = vmatpush.bf16.msra.mxu0 0
        %524 = vmatpush.bf16.msra.mxu0 0
        %525 = vmatpush.bf16.msra.mxu0 0
        %526 = vmatpush.bf16.msra.mxu0 %v244
        %527 = vmatpush.bf16.msra.mxu0 %v243
        %528 = vmatmul.bf16.gmra.mxu0 %v518
        %v529 = vpop.f32.mrf.mxu0
        %v530 = vadd.f32 0.0, %v529
        %v531 = vpop.f32.mrf.mxu0
        %532 = vdwg.mxu0
        %v533 = vadd.f32 %v301, %v530
        %v534 = vxor.u32 %v533, 2147483648
        %v535 = vmul.f32 %v534, 1.442695
        %v536 = vpow.pop %v535
        %v537 = vadd.f32 %v536, 1.0
        %v538 = vrcp.pop %v537
        %v539 = vmul.f32 %v537, %v538
        %v540 = vsub.f32 1.0, %v539
        %v541 = vmul.f32 %v538, %v540
        %v542 = vadd.f32 %v538, %v541
        %vm543 = vweird.f32 %v537
        %vm544 = vweird.f32 %v538
        %vm545 = vmor %vm543, %vm544
        %v546 = vsel %vm545, %v538, %v542
        %v547 = vand.u32 2147483647, %v537
        %vm548 = vcmp.eq.f32.partialorder %v547, 8.507059e+37
        %v549 = vand.u32 %v537, 2147483648
        %v550 = vor.u32 1.1754944e-38, %v549
        %v551 = vsel %vm548, %v550, %v546
        %v552 = vmul.f32 1.0, %v551
        %v553 = vtanh.pop %v533
        %v554 = vmul.f32 %v552, %v505
        %556 = vrot.lane.b32.xlu0 %v553, 64
        %v557 = vpop.permute.xlu0 %556
        %v559 = vmul.f32 %v552, %v557
        %561 = vrot.lane.b32.xlu0 %v559, 32
        %v562 = vpop.permute.xlu0 %561
        %v564 = vadd.f32 %v554, %v562
        %v565 = vtanh.pop %v564
        %567 = vrot.lane.b32.xlu0 %v565, 64
        %v568 = vpop.permute.xlu0 %567
        %v570 = vmul.f32 %v552, %v568
        %v571 = vadd.f32 %v512, %v570
        %v572 = vpack.c.bf16 %v570, %v570
        %574 = vrot.lane.b32.xlu0 %v572, 32
        %v575 = vpop.permute.xlu0 %574
        %v577 = vsel %vm249, %v575, 0
        %579 = vmatpush.bf16.msra.mxu0 0
        %580 = vmatpush.bf16.msra.mxu0 0
        %581 = vmatpush.bf16.msra.mxu0 0
        %582 = vmatpush.bf16.msra.mxu0 0
        %583 = vmatpush.bf16.msra.mxu0 0
        %584 = vmatpush.bf16.msra.mxu0 0
        %585 = vmatpush.bf16.msra.mxu0 %v244
        %586 = vmatpush.bf16.msra.mxu0 %v243
        %587 = vmatmul.bf16.gmra.mxu0 %v577
        %v588 = vpop.f32.mrf.mxu0
        %v589 = vadd.f32 0.0, %v588
        %v590 = vpop.f32.mrf.mxu0
        %591 = vdwg.mxu0
        %v592 = vadd.f32 %v320, %v589
        %v593 = vxor.u32 %v592, 2147483648
        %v594 = vmul.f32 %v593, 1.442695
        %v595 = vpow.pop %v594
        %v596 = vadd.f32 %v595, 1.0
        %v597 = vrcp.pop %v596
        %v598 = vmul.f32 %v596, %v597
        %v599 = vsub.f32 1.0, %v598
        %v600 = vmul.f32 %v597, %v599
        %v601 = vadd.f32 %v597, %v600
        %vm602 = vweird.f32 %v596
        %vm603 = vweird.f32 %v597
        %vm604 = vmor %vm602, %vm603
        %v605 = vsel %vm604, %v597, %v601
        %v606 = vand.u32 2147483647, %v596
        %vm607 = vcmp.eq.f32.partialorder %v606, 8.507059e+37
        %v608 = vand.u32 %v596, 2147483648
        %v609 = vor.u32 1.1754944e-38, %v608
        %v610 = vsel %vm607, %v609, %v605
        %v611 = vmul.f32 1.0, %v610
        %v612 = vtanh.pop %v592
        %v613 = vmul.f32 %v611, %v564
        %615 = vrot.lane.b32.xlu0 %v612, 64
        %v616 = vpop.permute.xlu0 %615
        %v618 = vmul.f32 %v611, %v616
        %620 = vrot.lane.b32.xlu0 %v618, 32
        %v621 = vpop.permute.xlu0 %620
        %v623 = vadd.f32 %v613, %v621
        %v624 = vtanh.pop %v623
        %626 = vrot.lane.b32.xlu0 %v624, 64
        %v627 = vpop.permute.xlu0 %626
        %v629 = vmul.f32 %v611, %v627
        %v630 = vadd.f32 %v571, %v629
        %v631 = vpack.c.bf16 %v629, %v629
        %633 = vrot.lane.b32.xlu0 %v631, 32
        %v634 = vpop.permute.xlu0 %633
        %v636 = vsel %vm249, %v634, 0
        %638 = vmatpush.bf16.msra.mxu0 0
        %639 = vmatpush.bf16.msra.mxu0 0
        %640 = vmatpush.bf16.msra.mxu0 0
        %641 = vmatpush.bf16.msra.mxu0 0
        %642 = vmatpush.bf16.msra.mxu0 0
        %643 = vmatpush.bf16.msra.mxu0 0
        %644 = vmatpush.bf16.msra.mxu0 %v244
        %645 = vmatpush.bf16.msra.mxu0 %v243
        %646 = vmatmul.bf16.gmra.mxu0 %v636
        %v647 = vpop.f32.mrf.mxu0
        %v648 = vadd.f32 0.0, %v647
        %v649 = vpop.f32.mrf.mxu0
        %650 = vdwg.mxu0
        %v651 = vadd.f32 %v339, %v648
        %v652 = vxor.u32 %v651, 2147483648
        %v653 = vmul.f32 %v652, 1.442695
        %v654 = vpow.pop %v653
        %v655 = vadd.f32 %v654, 1.0
        %v656 = vrcp.pop %v655
        %v657 = vmul.f32 %v655, %v656
        %v658 = vsub.f32 1.0, %v657
        %v659 = vmul.f32 %v656, %v658
        %v660 = vadd.f32 %v656, %v659
        %vm661 = vweird.f32 %v655
        %vm662 = vweird.f32 %v656
        %vm663 = vmor %vm661, %vm662
        %v664 = vsel %vm663, %v656, %v660
        %v665 = vand.u32 2147483647, %v655
        %vm666 = vcmp.eq.f32.partialorder %v665, 8.507059e+37
        %v667 = vand.u32 %v655, 2147483648
        %v668 = vor.u32 1.1754944e-38, %v667
        %v669 = vsel %vm666, %v668, %v664
        %v670 = vmul.f32 1.0, %v669
        %v671 = vtanh.pop %v651
        %v672 = vmul.f32 %v670, %v623
        %674 = vrot.lane.b32.xlu0 %v671, 64
        %v675 = vpop.permute.xlu0 %674
        %v677 = vmul.f32 %v670, %v675
        %679 = vrot.lane.b32.xlu0 %v677, 32
        %v680 = vpop.permute.xlu0 %679
        %v682 = vadd.f32 %v672, %v680
        %v683 = vtanh.pop %v682
        %685 = vrot.lane.b32.xlu0 %v683, 64
        %v686 = vpop.permute.xlu0 %685
        %v688 = vmul.f32 %v670, %v686
        %v689 = vadd.f32 %v630, %v688
        %v690 = vpack.c.bf16 %v688, %v688
        %692 = vrot.lane.b32.xlu0 %v690, 32
        %v693 = vpop.permute.xlu0 %692
        %v695 = vsel %vm249, %v693, 0
        %697 = vmatpush.bf16.msra.mxu0 0
        %698 = vmatpush.bf16.msra.mxu0 0
        %699 = vmatpush.bf16.msra.mxu0 0
        %700 = vmatpush.bf16.msra.mxu0 0
        %701 = vmatpush.bf16.msra.mxu0 0
        %702 = vmatpush.bf16.msra.mxu0 0
        %703 = vmatpush.bf16.msra.mxu0 %v244
        %704 = vmatpush.bf16.msra.mxu0 %v243
        %705 = vmatmul.bf16.gmra.mxu0 %v695
        %v706 = vpop.f32.mrf.mxu0
        %v707 = vadd.f32 0.0, %v706
        %v708 = vpop.f32.mrf.mxu0
        %709 = vdwg.mxu0
        %v710 = vadd.f32 %v358, %v707
        %v711 = vxor.u32 %v710, 2147483648
        %v712 = vmul.f32 %v711, 1.442695
        %v713 = vpow.pop %v712
        %v714 = vadd.f32 %v713, 1.0
        %v715 = vrcp.pop %v714
        %v716 = vmul.f32 %v714, %v715
        %v717 = vsub.f32 1.0, %v716
        %v718 = vmul.f32 %v715, %v717
        %v719 = vadd.f32 %v715, %v718
        %vm720 = vweird.f32 %v714
        %vm721 = vweird.f32 %v715
        %vm722 = vmor %vm720, %vm721
        %v723 = vsel %vm722, %v715, %v719
        %v724 = vand.u32 2147483647, %v714
        %vm725 = vcmp.eq.f32.partialorder %v724, 8.507059e+37
        %v726 = vand.u32 %v714, 2147483648
        %v727 = vor.u32 1.1754944e-38, %v726
        %v728 = vsel %vm725, %v727, %v723
        %v729 = vmul.f32 1.0, %v728
        %v730 = vtanh.pop %v710
        %v731 = vmul.f32 %v729, %v682
        %733 = vrot.lane.b32.xlu0 %v730, 64
        %v734 = vpop.permute.xlu0 %733
        %v736 = vmul.f32 %v729, %v734
        %738 = vrot.lane.b32.xlu0 %v736, 32
        %v739 = vpop.permute.xlu0 %738
        %v741 = vadd.f32 %v731, %v739
        %v742 = vtanh.pop %v741
        %744 = vrot.lane.b32.xlu0 %v742, 64
        %v745 = vpop.permute.xlu0 %744
        %v747 = vmul.f32 %v729, %v745
        %v748 = vadd.f32 %v689, %v747
        %v749 = vpack.c.bf16 %v747, %v747
        %751 = vrot.lane.b32.xlu0 %v749, 32
        %v752 = vpop.permute.xlu0 %751
        %v754 = vsel %vm249, %v752, 0
        %756 = vmatpush.bf16.msra.mxu0 0
        %757 = vmatpush.bf16.msra.mxu0 0
        %758 = vmatpush.bf16.msra.mxu0 0
        %759 = vmatpush.bf16.msra.mxu0 0
        %760 = vmatpush.bf16.msra.mxu0 0
        %761 = vmatpush.bf16.msra.mxu0 0
        %762 = vmatpush.bf16.msra.mxu0 %v244
        %763 = vmatpush.bf16.msra.mxu0 %v243
        %764 = vmatmul.bf16.gmra.mxu0 %v754
        %v765 = vpop.f32.mrf.mxu0
        %v766 = vadd.f32 0.0, %v765
        %v767 = vpop.f32.mrf.mxu0
        %768 = vdwg.mxu0
        %v769 = vadd.f32 %v377, %v766
        %v770 = vxor.u32 %v769, 2147483648
        %v771 = vmul.f32 %v770, 1.442695
        %v772 = vpow.pop %v771
        %v773 = vadd.f32 %v772, 1.0
        %v774 = vrcp.pop %v773
        %v775 = vmul.f32 %v773, %v774
        %v776 = vsub.f32 1.0, %v775
        %v777 = vmul.f32 %v774, %v776
        %v778 = vadd.f32 %v774, %v777
        %vm779 = vweird.f32 %v773
        %vm780 = vweird.f32 %v774
        %vm781 = vmor %vm779, %vm780
        %v782 = vsel %vm781, %v774, %v778
        %v783 = vand.u32 2147483647, %v773
        %vm784 = vcmp.eq.f32.partialorder %v783, 8.507059e+37
        %v785 = vand.u32 %v773, 2147483648
        %v786 = vor.u32 1.1754944e-38, %v785
        %v787 = vsel %vm784, %v786, %v782
        %v788 = vmul.f32 1.0, %v787
        %v789 = vtanh.pop %v769
        %v790 = vmul.f32 %v788, %v741
        %792 = vrot.lane.b32.xlu0 %v789, 64
        %v793 = vpop.permute.xlu0 %792
        %v795 = vmul.f32 %v788, %v793
        %797 = vrot.lane.b32.xlu0 %v795, 32
        %v798 = vpop.permute.xlu0 %797
        %v800 = vadd.f32 %v790, %v798
        %v801 = vtanh.pop %v800
        %803 = vrot.lane.b32.xlu0 %v801, 64
        %v804 = vpop.permute.xlu0 %803
        %v806 = vmul.f32 %v788, %v804
        %v807 = vadd.f32 %v748, %v806
        %v808 = vpack.c.bf16 %v806, %v806
        %810 = vrot.lane.b32.xlu0 %v808, 32
        %v811 = vpop.permute.xlu0 %810
        %v813 = vsel %vm249, %v811, 0
        %815 = vmatpush.bf16.msra.mxu0 0
        %816 = vmatpush.bf16.msra.mxu0 0
        %817 = vmatpush.bf16.msra.mxu0 0
        %818 = vmatpush.bf16.msra.mxu0 0
        %819 = vmatpush.bf16.msra.mxu0 0
        %820 = vmatpush.bf16.msra.mxu0 0
        %821 = vmatpush.bf16.msra.mxu0 %v244
        %822 = vmatpush.bf16.msra.mxu0 %v243
        %823 = vmatmul.bf16.gmra.mxu0 %v813
        %v824 = vpop.f32.mrf.mxu0
        %v825 = vadd.f32 0.0, %v824
        %v826 = vpop.f32.mrf.mxu0
        %827 = vdwg.mxu0
        %v828 = vadd.f32 %v396, %v825
        %v829 = vxor.u32 %v828, 2147483648
        %v830 = vmul.f32 %v829, 1.442695
        %v831 = vpow.pop %v830
        %v832 = vadd.f32 %v831, 1.0
        %v833 = vrcp.pop %v832
        %v834 = vmul.f32 %v832, %v833
        %v835 = vsub.f32 1.0, %v834
        %v836 = vmul.f32 %v833, %v835
        %v837 = vadd.f32 %v833, %v836
        %vm838 = vweird.f32 %v832
        %vm839 = vweird.f32 %v833
        %vm840 = vmor %vm838, %vm839
        %v841 = vsel %vm840, %v833, %v837
        %v842 = vand.u32 2147483647, %v832
        %vm843 = vcmp.eq.f32.partialorder %v842, 8.507059e+37
        %v844 = vand.u32 %v832, 2147483648
        %v845 = vor.u32 1.1754944e-38, %v844
        %v846 = vsel %vm843, %v845, %v841
        %v847 = vmul.f32 1.0, %v846
        %v848 = vtanh.pop %v828
        %v849 = vmul.f32 %v847, %v800
        %851 = vrot.lane.b32.xlu0 %v848, 64
        %v852 = vpop.permute.xlu0 %851
        %v854 = vmul.f32 %v847, %v852
        %856 = vrot.lane.b32.xlu0 %v854, 32
        %v857 = vpop.permute.xlu0 %856
        %v859 = vadd.f32 %v849, %v857
        %v860 = vtanh.pop %v859
        %862 = vrot.lane.b32.xlu0 %v860, 64
        %v863 = vpop.permute.xlu0 %862
        %v865 = vmul.f32 %v847, %v863
        %v866 = vadd.f32 %v807, %v865
        %v867 = vld [vmem:[%s2] sm:$0xff]
        %v868 = vld [vmem:[%s2 + $0x8] sm:$0xff]
        %v869 = vld [vmem:[%s2 + $0x10] sm:$0xff]
        %v870 = vld [vmem:[%s2 + $0x18] sm:$0xff]
        %v871 = vpack.c.bf16 %v868, %v867
        %v872 = vpack.c.bf16 %v870, %v869
        %v873 = vld [vmem:[%s2 + $0x20] sm:$0x1]
        %v874 = vpack.c.bf16 %v866, %v866
        %v875 = vperm.slane %v873, 0
        %877 = vrot.lane.b32.xlu0 %v874, 32
        %v878 = vpop.permute.xlu0 %877
        %v880 = vsel %vm249, %v878, 0
        %882 = vmatpush.bf16.msra.mxu0 0
        %883 = vmatpush.bf16.msra.mxu0 0
        %884 = vmatpush.bf16.msra.mxu0 0
        %885 = vmatpush.bf16.msra.mxu0 0
        %886 = vmatpush.bf16.msra.mxu0 0
        %887 = vmatpush.bf16.msra.mxu0 0
        %888 = vmatpush.bf16.msra.mxu0 %v872
        %889 = vmatpush.bf16.msra.mxu0 %v871
        %890 = vmatmul.bf16.gmra.mxu0 %v880
        %v891 = vpop.f32.mrf.mxu0
        %v892 = vadd.f32 %v875, %v891
        %v893 = vpop.f32.mrf.mxu0
        %894 = vdwg.mxu0
        %895 = vst [vmem:[%s231] sm:$0xff] %v892
        %p896 = scmp.lt.s32.totalorder %s14, 1
        %s897 = scalar_select %p896, %s14, 1
        %s898 = smul.addr %s897, 8
        %s899 = scalar_lea.vmem %s3, %s898
        // Predicated region
        $region71: #{forward_batch.1} parent=65 // pred_check
          %p900 = pneg %p100
        $region72: #{forward_batch.1} parent=65 // pred_check_branch
          %902 = sbr.rel (%p900) target = $region74
        $region73: #{forward_batch.1} parent=65 // pred_region
          _
        $region74: #{forward_batch.1} parent=65 // pred_fallthru
          _
      $region66: #{forward_batch.1} parent=5 // pred_fallthru
        _
      %p903 = scmp.le.s32.totalorder 2, %s9
      // Predicated region
      $region75: #{forward_batch.1} parent=5 // pred_check
        %p904 = pneg %p903
      $region76: #{forward_batch.1} parent=5 // pred_check_branch
        %906 = sbr.rel (%p904) target = $region78
      $region77: #{forward_batch.1} parent=5 // pred_region
        %s907 = ssub.s32 %s9, 2
        // Predicated region
        $region79: #{forward_batch.1} parent=77 // pred_check
          %p908 = pneg %p106
        $region80: #{forward_batch.1} parent=77 // pred_check_branch
          %910 = sbr.rel (%p908) target = $region82
        $region81: #{forward_batch.1} parent=77 // pred_region
          %p911 = scmp.lt.s32.totalorder %s15, 1
          %s912 = scalar_select %p911, %s15, 1
          %s913 = smul.addr %s912, 8
          %s914 = scalar_lea.vmem %s3, %s913
        $region82: #{forward_batch.1} parent=77 // pred_fallthru
          _
      $region78: #{forward_batch.1} parent=5 // pred_fallthru
        _
    $region6: #{forward_batch.1} parent=1 // loop_footer
      %s13 = sadd.s32 1, %s9
    $region7: #{forward_batch.1} parent=1 // loop_footer_branch
      %8 = sbr.rel target = $region3
    $region8: #{forward_batch.1} parent=1 // loop_exit
      _

</llo_original>
